<compile_context>
chip_gen: v7x
topology: tpu7x:2x2x1
jax: 0.10.0
libtpu: 0.0.40
codegen_flags: <defaults>
</compile_context>

<pallas_src>
import functools

import jax
import jax.numpy as jnp
from jax.experimental import pallas as pl
from jax.experimental.pallas import tpu as pltpu

LANE = 128


def _round_up(v, m):
    return ((v + m - 1) // m) * m


# ----------------------------- Pallas kernel -------------------------------

def net2_fused_kernel(a_ref, x_ref, w1t_ref, b1_ref, w2t_ref, b2_ref, idx_ref,
                      o_ref, *, n, e_pad):
    """Fused Net2 forward: 2x GCN layer + edge decode, all resident in VMEM.

    a    : (N, N)         symmetric-normalized dense adjacency (bf16)
    x    : (N, IN_CH)     node features (bf16)
    w1t  : (IN_CH, Hp)    conv1 weight, pre-transposed + lane-padded (bf16)
    b1   : (1, Hp)        conv1 bias, lane-padded (f32)
    w2t  : (Hp, Cp)       conv2 weight, pre-transposed + lane-padded (bf16)
    b2   : (1, Cp)        conv2 bias, lane-padded (f32)
    idx  : (2*Ep, 1)      int32 edge endpoints (src rows, then dst rows)
    o    : (Ep, 128)      per-edge scores replicated across lanes (f32)
    """
    a = a_ref[...]                                             # (N, N) bf16

    # layer 1: h = relu(A @ (X @ W1^T + b1))        -> (N, Hp)
    xw = jnp.dot(x_ref[...], w1t_ref[...], preferred_element_type=jnp.float32)
    xw = xw + b1_ref[...]                                      # f32 VPU
    h = jnp.dot(a, xw.astype(jnp.bfloat16), preferred_element_type=jnp.float32)
    h = jnp.maximum(h, 0.0)                                    # f32 VPU

    # layer 2: z = A @ (h @ W2^T + b2)              -> (N, Cp)
    hw = jnp.dot(h.astype(jnp.bfloat16), w2t_ref[...],
                 preferred_element_type=jnp.float32)
    hw = hw + b2_ref[...]
    z = jnp.dot(a, hw.astype(jnp.bfloat16), preferred_element_type=jnp.float32)

    # decode: build the combined src/dst one-hot (2*Ep, N) in-kernel from the
    # int32 endpoint indices and gather both endpoints with ONE MXU push of z.
    # Padded edges gather node 0; their rows are sliced off by the wrapper.
    idx = idx_ref[...]                                         # (2*Ep, 1) i32
    node_iota = jax.lax.broadcasted_iota(jnp.int32, (2 * e_pad, n), 1)
    one_hot = jnp.where(node_iota == idx, 1.0, 0.0).astype(jnp.bfloat16)
    zz = jnp.dot(one_hot, z.astype(jnp.bfloat16),
                 preferred_element_type=jnp.float32)           # (2*Ep, Cp) f32
    prod = zz[:e_pad] * zz[e_pad:]                             # (Ep, Cp) f32

    # Per-edge channel reduce on the MXU (f32 for accuracy).  The ones operand
    # is replicated to 128 lanes so the output stays 2-D and lane-dense
    # (unmasked stores); zero-padded channels contribute 0 to the sum.
    ones = jnp.ones((prod.shape[1], o_ref.shape[1]), jnp.float32)
    o_ref[...] = jnp.dot(prod, ones, preferred_element_type=jnp.float32)


# ------------------------------ JAX wrappers --------------------------------

def build_norm_adjacency(edge_index, num_nodes):
    """Dense [N, N] matrix equivalent to torch.sparse.FloatTensor(edge_index, norm)."""
    row, col = edge_index[0], edge_index[1]
    deg = jnp.zeros((num_nodes,), jnp.float32).at[row].add(1.0)  # torch.bincount(row)
    deg_inv_sqrt = deg ** -0.5
    deg_inv_sqrt = jnp.where(jnp.isinf(deg_inv_sqrt), 0.0, deg_inv_sqrt)
    norm = deg_inv_sqrt[row] * deg_inv_sqrt[col]
    a = jnp.zeros((num_nodes, num_nodes), jnp.float32).at[row, col].add(norm)
    return a


def net2_forward(params, x, pos_edge_index, neg_edge_index):
    n = x.shape[0]
    a = build_norm_adjacency(pos_edge_index, n).astype(jnp.bfloat16)

    hidden = params["w1"].shape[0]
    out_ch = params["w2"].shape[0]
    h_pad = _round_up(hidden, LANE)
    c_pad = _round_up(out_ch, LANE)

    # Pre-transpose + zero-pad weights to lane-dense (x128) widths; MXU
    # operands are shipped as bf16, biases stay f32 for the VPU add.
    w1t = (jnp.zeros((x.shape[1], h_pad), jnp.float32)
           .at[:, :hidden].set(params["w1"].T).astype(jnp.bfloat16))
    b1 = jnp.zeros((1, h_pad), jnp.float32).at[0, :hidden].set(params["b1"])
    w2t = (jnp.zeros((h_pad, c_pad), jnp.float32)
           .at[:hidden, :out_ch].set(params["w2"].T).astype(jnp.bfloat16))
    b2 = jnp.zeros((1, c_pad), jnp.float32).at[0, :out_ch].set(params["b2"])

    # Edge endpoints as a single padded int32 index vector (src rows, then dst
    # rows) — the kernel rebuilds the one-hot gather on-chip.
    edge_index = jnp.concatenate([pos_edge_index, neg_edge_index], axis=-1)
    e = edge_index.shape[1]
    e_pad = _round_up(e, LANE)
    pad = e_pad - e
    src = jnp.concatenate([edge_index[0], jnp.zeros((pad,), jnp.int32)])
    dst = jnp.concatenate([edge_index[1], jnp.zeros((pad,), jnp.int32)])
    idx = jnp.concatenate([src, dst]).astype(jnp.int32).reshape(2 * e_pad, 1)

    kernel = functools.partial(net2_fused_kernel, n=n, e_pad=e_pad)
    scores = pl.pallas_call(
        kernel,
        out_shape=jax.ShapeDtypeStruct((e_pad, LANE), jnp.float32),
        in_specs=[pl.BlockSpec(memory_space=pltpu.MemorySpace.VMEM)] * 7,
        out_specs=pl.BlockSpec(memory_space=pltpu.MemorySpace.VMEM),
    )(a, x.astype(jnp.bfloat16), w1t, b1, w2t, b2, idx)
    # Column 0 carries the score; padded edge rows are garbage and sliced off.
    return scores[:e, 0]


# ------------------------------- reference ----------------------------------

def net2_forward_ref(params, x, pos_edge_index, neg_edge_index):
    n = x.shape[0]
    a = build_norm_adjacency(pos_edge_index, n)
    h = jnp.maximum(a @ (x @ params["w1"].T + params["b1"]), 0.0)
    z = a @ (h @ params["w2"].T + params["b2"])
    edge_index = jnp.concatenate([pos_edge_index, neg_edge_index], axis=-1)
    return jnp.sum(z[edge_index[0]] * z[edge_index[1]], axis=-1)


# --------------------------------- main --------------------------------------

if __name__ == "__main__":
    key = jax.random.PRNGKey(0)
    k_x, k_w1, k_b1, k_w2, k_b2, k_neg = jax.random.split(key, 6)

    N = 16           # number of nodes
    IN_CH = 8        # dataset.num_features (small synthetic)
    HIDDEN = 64      # hardcoded in Net2.conv1
    OUT_CH = 32      # out_channels

    x = jax.random.normal(k_x, (N, IN_CH), jnp.float32)

    # Deterministic parameter init (nn.Linear shapes: weight (out, in), bias (out,))
    params = {
        "w1": jax.random.normal(k_w1, (HIDDEN, IN_CH), jnp.float32) * 0.1,
        "b1": jax.random.normal(k_b1, (HIDDEN,), jnp.float32) * 0.1,
        "w2": jax.random.normal(k_w2, (OUT_CH, HIDDEN), jnp.float32) * 0.1,
        "b2": jax.random.normal(k_b2, (OUT_CH,), jnp.float32) * 0.1,
    }

    # Synthetic graph: bidirectional ring (2N positive edges), random negatives.
    src = jnp.arange(N, dtype=jnp.int32)
    dst = (src + 1) % N
    pos_edge_index = jnp.stack(
        [jnp.concatenate([src, dst]), jnp.concatenate([dst, src])], axis=0
    )
    neg_edge_index = jax.random.randint(k_neg, (2, 8), 0, N, dtype=jnp.int32)

    out = net2_forward(params, x, pos_edge_index, neg_edge_index)
    out = jax.block_until_ready(out)

    ref = net2_forward_ref(params, x, pos_edge_index, neg_edge_index)
    assert out.shape == (pos_edge_index.shape[1] + neg_edge_index.shape[1],)
    # bf16 MXU operands (f32 accumulation) vs. pure-f32 reference: loosened tol.
    assert jnp.allclose(out, ref, atol=2e-2, rtol=2e-2), "mismatch vs JAX reference"

    print("KERNEL_OK")
</pallas_src>

<mosaic_0001>
module attributes {stable_mosaic.version = 11 : i64} {
  func.func @net2_fused_kernel(%arg0: memref<16x16xbf16, #tpu.memory_space<vmem>>, %arg1: memref<16x8xbf16, #tpu.memory_space<vmem>>, %arg2: memref<8x128xbf16, #tpu.memory_space<vmem>>, %arg3: memref<1x128xf32, #tpu.memory_space<vmem>>, %arg4: memref<128x128xbf16, #tpu.memory_space<vmem>>, %arg5: memref<1x128xf32, #tpu.memory_space<vmem>>, %arg6: memref<256x1xi32, #tpu.memory_space<vmem>>, %arg7: memref<128x128xf32, #tpu.memory_space<vmem>>) attributes {dimension_semantics = [], scalar_prefetch = 0 : i64, scratch_operands = 0 : i64, tpu.core_type = #tpu.core_type<tc>} {
    %c0 = arith.constant 0 : index
    %c0_0 = arith.constant 0 : index
    %0 = vector.load %arg0[%c0, %c0_0] : memref<16x16xbf16, #tpu.memory_space<vmem>>, vector<16x16xbf16>
    %c0_1 = arith.constant 0 : index
    %c0_2 = arith.constant 0 : index
    %1 = vector.load %arg1[%c0_1, %c0_2] : memref<16x8xbf16, #tpu.memory_space<vmem>>, vector<16x8xbf16>
    %c0_3 = arith.constant 0 : index
    %c0_4 = arith.constant 0 : index
    %2 = vector.load %arg2[%c0_3, %c0_4] : memref<8x128xbf16, #tpu.memory_space<vmem>>, vector<8x128xbf16>
    %cst = arith.constant dense<0.000000e+00> : vector<16x128xf32>
    %3 = tpu.matmul %1, %2, %cst {dimension_numbers = #tpu.dot_dimension_numbers<[1], [0], [0], [1], [0, 0, 1, 1], [], []>} : vector<16x8xbf16>, vector<8x128xbf16>, vector<16x128xf32> -> vector<16x128xf32>
    %c0_5 = arith.constant 0 : index
    %c0_6 = arith.constant 0 : index
    %4 = vector.load %arg3[%c0_5, %c0_6] : memref<1x128xf32, #tpu.memory_space<vmem>>, vector<1x128xf32>
    %5 = vector.broadcast %4 : vector<1x128xf32> to vector<16x128xf32>
    %6 = arith.addf %3, %5 : vector<16x128xf32>
    %7 = arith.truncf %6 : vector<16x128xf32> to vector<16x128xbf16>
    %cst_7 = arith.constant dense<0.000000e+00> : vector<16x128xf32>
    %8 = tpu.matmul %0, %7, %cst_7 {dimension_numbers = #tpu.dot_dimension_numbers<[1], [0], [0], [1], [0, 0, 1, 1], [], []>} : vector<16x16xbf16>, vector<16x128xbf16>, vector<16x128xf32> -> vector<16x128xf32>
    %cst_8 = arith.constant 0.000000e+00 : f32
    %9 = vector.broadcast %cst_8 : f32 to vector<16x128xf32>
    %10 = arith.maximumf %8, %9 : vector<16x128xf32>
    %11 = arith.truncf %10 : vector<16x128xf32> to vector<16x128xbf16>
    %c0_9 = arith.constant 0 : index
    %c0_10 = arith.constant 0 : index
    %12 = vector.load %arg4[%c0_9, %c0_10] : memref<128x128xbf16, #tpu.memory_space<vmem>>, vector<128x128xbf16>
    %cst_11 = arith.constant dense<0.000000e+00> : vector<16x128xf32>
    %13 = tpu.matmul %11, %12, %cst_11 {dimension_numbers = #tpu.dot_dimension_numbers<[1], [0], [0], [1], [0, 0, 1, 1], [], []>} : vector<16x128xbf16>, vector<128x128xbf16>, vector<16x128xf32> -> vector<16x128xf32>
    %c0_12 = arith.constant 0 : index
    %c0_13 = arith.constant 0 : index
    %14 = vector.load %arg5[%c0_12, %c0_13] : memref<1x128xf32, #tpu.memory_space<vmem>>, vector<1x128xf32>
    %15 = vector.broadcast %14 : vector<1x128xf32> to vector<16x128xf32>
    %16 = arith.addf %13, %15 : vector<16x128xf32>
    %17 = arith.truncf %16 : vector<16x128xf32> to vector<16x128xbf16>
    %cst_14 = arith.constant dense<0.000000e+00> : vector<16x128xf32>
    %18 = tpu.matmul %0, %17, %cst_14 {dimension_numbers = #tpu.dot_dimension_numbers<[1], [0], [0], [1], [0, 0, 1, 1], [], []>} : vector<16x16xbf16>, vector<16x128xbf16>, vector<16x128xf32> -> vector<16x128xf32>
    %c0_15 = arith.constant 0 : index
    %c0_16 = arith.constant 0 : index
    %19 = vector.load %arg6[%c0_15, %c0_16] : memref<256x1xi32, #tpu.memory_space<vmem>>, vector<256x1xi32>
    %20 = tpu.iota {dimensions = array<i32: 1>} : vector<256x16xi32>
    %21 = vector.broadcast %19 : vector<256x1xi32> to vector<256x16xi32>
    %22 = arith.cmpi eq, %20, %21 : vector<256x16xi32>
    %cst_17 = arith.constant 1.000000e+00 : f32
    %cst_18 = arith.constant 0.000000e+00 : f32
    %23 = vector.broadcast %cst_17 : f32 to vector<256x16xf32>
    %24 = vector.broadcast %cst_18 : f32 to vector<256x16xf32>
    %25 = arith.select %22, %23, %24 : vector<256x16xi1>, vector<256x16xf32>
    %26 = arith.truncf %25 : vector<256x16xf32> to vector<256x16xbf16>
    %27 = arith.truncf %18 : vector<16x128xf32> to vector<16x128xbf16>
    %cst_19 = arith.constant dense<0.000000e+00> : vector<256x128xf32>
    %28 = tpu.matmul %26, %27, %cst_19 {dimension_numbers = #tpu.dot_dimension_numbers<[1], [0], [0], [1], [0, 0, 1, 1], [], []>} : vector<256x16xbf16>, vector<16x128xbf16>, vector<256x128xf32> -> vector<256x128xf32>
    %29 = vector.extract_strided_slice %28 {offsets = [0, 0], sizes = [128, 128], strides = [1, 1]} : vector<256x128xf32> to vector<128x128xf32>
    %30 = vector.extract_strided_slice %28 {offsets = [128, 0], sizes = [128, 128], strides = [1, 1]} : vector<256x128xf32> to vector<128x128xf32>
    %31 = arith.mulf %29, %30 : vector<128x128xf32>
    %cst_20 = arith.constant 1.000000e+00 : f32
    %32 = vector.broadcast %cst_20 : f32 to vector<128x128xf32>
    %cst_21 = arith.constant dense<0.000000e+00> : vector<128x128xf32>
    %33 = tpu.matmul %31, %32, %cst_21 {dimension_numbers = #tpu.dot_dimension_numbers<[1], [0], [0], [1], [0, 0, 1, 1], [], []>} : vector<128x128xf32>, vector<128x128xf32>, vector<128x128xf32> -> vector<128x128xf32>
    %c0_22 = arith.constant 0 : index
    %c0_23 = arith.constant 0 : index
    %34 = vector.load %arg7[%c0_22, %c0_23] : memref<128x128xf32, #tpu.memory_space<vmem>>, vector<128x128xf32>
    tpu.vector_store %arg7[%c0_22, %c0_23], %33 {strides = array<i32>} : memref<128x128xf32, #tpu.memory_space<vmem>>, vector<128x128xf32>,
    return
  }
}

</mosaic_0001>

<llo_original>
// kernel: tpu_custom_call.1
$region0: #{tpu_custom_call.1}
  #allocation0 [shape = 'u32[]', space=smem, size = 0x4, offset = 0x4, fixed_abs, tag = 'smem constant byte address 0x4 - core index']
  #allocation1 [shape = 'u32[144,128]{1,0:T(1,128)}', space=vmem, size = 0x12000, scoped, tag = 'internal scratch']
  %s0 = inlined_call_operand.vmem [shape: bf16[16,16], index: 0, kind: input, shape index: {}]
  %s1 = inlined_call_operand.vmem [shape: bf16[16,8], index: 1, kind: input, shape index: {}]
  %s2 = inlined_call_operand.vmem [shape: bf16[8,128], index: 2, kind: input, shape index: {}]
  %s3 = inlined_call_operand.vmem [shape: f32[1,128], index: 3, kind: input, shape index: {}]
  %s4 = inlined_call_operand.vmem [shape: bf16[128,128], index: 4, kind: input, shape index: {}]
  %s5 = inlined_call_operand.vmem [shape: f32[1,128], index: 5, kind: input, shape index: {}]
  %s6 = inlined_call_operand.vmem [shape: s32[256,1], index: 6, kind: input, shape index: {}]
  %s7 = inlined_call_operand.hbm [shape: f32[128,128], index: 7, kind: output, shape index: {}]
  %s8 = sld [smem:[#allocation0]]
  $region38: #{tpu_custom_call.1} parent=0
    _
  %s10 = ssub.s32 1, %s8
  %s11 = scalar_select 0, %s10, %s8
  $region1: #{tpu_custom_call.1} parent=0
    #allocation2 [shape = 'u8[65536]{0}', space=vmem, size = 0x10000, scoped, tag = 'output window, operand 0, single buffered']
    #allocation3 [shape = 's32[1]{0}', space=sflag, size = 0x4, scoped, tag = 'scoped memory for tpu_custom_call.1']
    %12 = vsyncpa [#allocation3], 0
    // Predicated region
    $region2: #{tpu_custom_call.1} parent=1 // pred_check
      _
    $region3: #{tpu_custom_call.1} parent=1 // pred_check_branch
      %14 = sbr.rel (0) target = $region5
    $region4: #{tpu_custom_call.1} parent=1 // pred_region
      _
    $region5: #{tpu_custom_call.1} parent=1 // pred_fallthru
      _
    // Predicated region
    $region6: #{tpu_custom_call.1} parent=1 // pred_check
      _
    $region7: #{tpu_custom_call.1} parent=1 // pred_check_branch
      %16 = sbr.rel (0) target = $region9
    $region8: #{tpu_custom_call.1} parent=1 // pred_region
      _
    $region9: #{tpu_custom_call.1} parent=1 // pred_fallthru
      _
    // Predicated region
    $region10: #{tpu_custom_call.1} parent=1 // pred_check
      _
    $region11: #{tpu_custom_call.1} parent=1 // pred_check_branch
      %18 = sbr.rel (0) target = $region13
    $region12: #{tpu_custom_call.1} parent=1 // pred_region
      _
    $region13: #{tpu_custom_call.1} parent=1 // pred_fallthru
      _
    // Predicated region
    $region14: #{tpu_custom_call.1} parent=1 // pred_check
      _
    $region15: #{tpu_custom_call.1} parent=1 // pred_check_branch
      %20 = sbr.rel (0) target = $region17
    $region16: #{tpu_custom_call.1} parent=1 // pred_region
      _
    $region17: #{tpu_custom_call.1} parent=1 // pred_fallthru
      _
    // Predicated region
    $region18: #{tpu_custom_call.1} parent=1 // pred_check
      _
    $region19: #{tpu_custom_call.1} parent=1 // pred_check_branch
      %22 = sbr.rel (0) target = $region21
    $region20: #{tpu_custom_call.1} parent=1 // pred_region
      _
    $region21: #{tpu_custom_call.1} parent=1 // pred_fallthru
      _
    // Predicated region
    $region22: #{tpu_custom_call.1} parent=1 // pred_check
      _
    $region23: #{tpu_custom_call.1} parent=1 // pred_check_branch
      %24 = sbr.rel (0) target = $region25
    $region24: #{tpu_custom_call.1} parent=1 // pred_region
      _
    $region25: #{tpu_custom_call.1} parent=1 // pred_fallthru
      _
    // Predicated region
    $region26: #{tpu_custom_call.1} parent=1 // pred_check
      _
    $region27: #{tpu_custom_call.1} parent=1 // pred_check_branch
      %26 = sbr.rel (0) target = $region29
    $region28: #{tpu_custom_call.1} parent=1 // pred_region
      _
    $region29: #{tpu_custom_call.1} parent=1 // pred_fallthru
      _
    %v28 = vld [vmem:[%s0] sm:$0xf]
    %v29 = vld [vmem:[%s0 + $0x4] sm:$0xf]
    %v30 = vld [vmem:[%s1] sm:$0xf]
    %v31 = vld [vmem:[%s1 + $0x4] sm:$0xf]
    %v32 = vld [vmem:[%s2] sm:$0xf]
    %v33 = vld [vmem:[%s3] sm:$0x1]
    %v35 = vlaneseq
    %v36 = vshrl.u32 %v35, 7
    %v37 = vsub.s32 0, %v36
    %v38 = vrot.slane %v33, %v37
    %v42 = vunpack.c.l.b16 %v30
    %v43 = vunpack.c.l.b16 %v31
    %v44 = vpack.c.b16 %v43, %v42
    %vm45 = vcmask 64512
    %v47 = vsel %vm45, %v44, 0
    %vm49 = vcmask 1043456
    %v51 = vsel %vm49, %v32, 0
    %53 = vmatprep.subr.bf16.mxu0 0
    %54 = vmatpush1.bf16.msra.mxu0 %v51
    %55 = vmatprep.subr.bf16.mxu0 0
    %56 = vmatpush1.bf16.msra.mxu0 0
    %57 = vmatprep.subr.bf16.mxu0 0
    %58 = vmatpush1.bf16.msra.mxu0 0
    %59 = vmatprep.subr.bf16.mxu0 0
    %60 = vmatpush1.bf16.msra.mxu0 0
    %61 = vmatprep.subr.bf16.mxu0 0
    %62 = vmatpush1.bf16.msra.mxu0 0
    %63 = vmatprep.subr.bf16.mxu0 0
    %64 = vmatpush1.bf16.msra.mxu0 0
    %65 = vmatprep.subr.bf16.mxu0 0
    %66 = vmatpush1.bf16.msra.mxu0 0
    %67 = vmatprep.subr.bf16.mxu0 0
    %68 = vmatpush1.bf16.msra.mxu0 0
    %69 = vmatprep.subr.bf16.mxu0 0
    %70 = vmatpush1.bf16.msra.mxu0 0
    %71 = vmatprep.subr.bf16.mxu0 0
    %72 = vmatpush1.bf16.msra.mxu0 0
    %73 = vmatprep.subr.bf16.mxu0 0
    %74 = vmatpush1.bf16.msra.mxu0 0
    %75 = vmatprep.subr.bf16.mxu0 0
    %76 = vmatpush1.bf16.msra.mxu0 0
    %77 = vmatprep.subr.bf16.mxu0 0
    %78 = vmatpush1.bf16.msra.mxu0 0
    %79 = vmatprep.subr.bf16.mxu0 0
    %80 = vmatpush1.bf16.msra.mxu0 0
    %81 = vmatprep.subr.bf16.mxu0 0
    %82 = vmatpush1.bf16.msra.mxu0 0
    %83 = vmatprep.subr.bf16.mxu0 0
    %84 = vmatpush1.bf16.msra.mxu0 0
    %85 = vmatprep.mubr.bf16.mxu0 0
    %86 = vmatmul.mubr.bf16.gmra.mrb[0].mxu0 %v47
    %v87 = vpop.f32.mrb[0].mxu0
    %v88 = vadd.f32 %v38, %v87
    %v89 = vpop.f32.mrb[0].mxu0
    %v90 = vpop.f32.mrb[0].mxu0
    %v91 = vadd.f32 %v38, %v90
    %v92 = vpop.f32.mrb[0].mxu0
    %93 = vdwg.mxu0
    %v94 = vpack.c.bf16 %v91, %v88
    %v97 = vunpack.c.l.b16 %v28
    %v98 = vunpack.c.l.b16 %v29
    %v99 = vpack.c.b16 %v98, %v97
    %vm100 = vcmask 130048
    %v102 = vsel %vm100, %v99, 0
    %104 = vmatprep.subr.bf16.mxu0 0
    %105 = vmatpush1.bf16.msra.mxu0 %v94
    %106 = vmatprep.subr.bf16.mxu0 0
    %107 = vmatpush1.bf16.msra.mxu0 0
    %108 = vmatprep.subr.bf16.mxu0 0
    %109 = vmatpush1.bf16.msra.mxu0 0
    %110 = vmatprep.subr.bf16.mxu0 0
    %111 = vmatpush1.bf16.msra.mxu0 0
    %112 = vmatprep.subr.bf16.mxu0 0
    %113 = vmatpush1.bf16.msra.mxu0 0
    %114 = vmatprep.subr.bf16.mxu0 0
    %115 = vmatpush1.bf16.msra.mxu0 0
    %116 = vmatprep.subr.bf16.mxu0 0
    %117 = vmatpush1.bf16.msra.mxu0 0
    %118 = vmatprep.subr.bf16.mxu0 0
    %119 = vmatpush1.bf16.msra.mxu0 0
    %120 = vmatprep.subr.bf16.mxu0 0
    %121 = vmatpush1.bf16.msra.mxu0 0
    %122 = vmatprep.subr.bf16.mxu0 0
    %123 = vmatpush1.bf16.msra.mxu0 0
    %124 = vmatprep.subr.bf16.mxu0 0
    %125 = vmatpush1.bf16.msra.mxu0 0
    %126 = vmatprep.subr.bf16.mxu0 0
    %127 = vmatpush1.bf16.msra.mxu0 0
    %128 = vmatprep.subr.bf16.mxu0 0
    %129 = vmatpush1.bf16.msra.mxu0 0
    %130 = vmatprep.subr.bf16.mxu0 0
    %131 = vmatpush1.bf16.msra.mxu0 0
    %132 = vmatprep.subr.bf16.mxu0 0
    %133 = vmatpush1.bf16.msra.mxu0 0
    %134 = vmatprep.subr.bf16.mxu0 0
    %135 = vmatpush1.bf16.msra.mxu0 0
    %136 = vmatprep.mubr.bf16.mxu0 0
    %137 = vmatmul.mubr.bf16.gmra.mrb[0].mxu0 %v102
    %v138 = vpop.f32.mrb[0].mxu0
    %v139 = vadd.f32 0.0, %v138
    %v140 = vpop.f32.mrb[0].mxu0
    %v141 = vpop.f32.mrb[0].mxu0
    %v142 = vadd.f32 0.0, %v141
    %v143 = vpop.f32.mrb[0].mxu0
    %144 = vdwg.mxu0
    %v145 = vmax.f32 %v139, 0.0
    %v146 = vmax.f32 %v142, 0.0
    %v147 = vpack.c.bf16 %v146, %v145
    %v148 = vld [vmem:[%s4] sm:$0xf]
    %v149 = vld [vmem:[%s4 + $0x4] sm:$0xf]
    %v150 = vld [vmem:[%s4 + $0x8] sm:$0xf]
    %v151 = vld [vmem:[%s4 + $0xc] sm:$0xf]
    %v152 = vld [vmem:[%s4 + $0x10] sm:$0xf]
    %v153 = vld [vmem:[%s4 + $0x14] sm:$0xf]
    %v154 = vld [vmem:[%s4 + $0x18] sm:$0xf]
    %v155 = vld [vmem:[%s4 + $0x1c] sm:$0xf]
    %v156 = vld [vmem:[%s4 + $0x20] sm:$0xf]
    %v157 = vld [vmem:[%s4 + $0x24] sm:$0xf]
    %v158 = vld [vmem:[%s4 + $0x28] sm:$0xf]
    %v159 = vld [vmem:[%s4 + $0x2c] sm:$0xf]
    %v160 = vld [vmem:[%s4 + $0x30] sm:$0xf]
    %v161 = vld [vmem:[%s4 + $0x34] sm:$0xf]
    %v162 = vld [vmem:[%s4 + $0x38] sm:$0xf]
    %v163 = vld [vmem:[%s4 + $0x3c] sm:$0xf]
    %v164 = vld [vmem:[%s5] sm:$0x1]
    %v166 = vlaneseq
    %v167 = vshrl.u32 %v166, 7
    %v168 = vsub.s32 0, %v167
    %v169 = vrot.slane %v164, %v168
    %v187 = vunpack.c.l.b16 %v148
    %v188 = vunpack.c.l.b16 %v149
    %v189 = vunpack.c.l.b16 %v150
    %v190 = vunpack.c.l.b16 %v151
    %v191 = vunpack.c.l.b16 %v152
    %v192 = vunpack.c.l.b16 %v153
    %v193 = vunpack.c.l.b16 %v154
    %v194 = vunpack.c.l.b16 %v155
    %v195 = vunpack.c.l.b16 %v156
    %v196 = vunpack.c.l.b16 %v157
    %v197 = vunpack.c.l.b16 %v158
    %v198 = vunpack.c.l.b16 %v159
    %v199 = vunpack.c.l.b16 %v160
    %v200 = vunpack.c.l.b16 %v161
    %v201 = vunpack.c.l.b16 %v162
    %v202 = vunpack.c.l.b16 %v163
    %v203 = vpack.c.b16 %v188, %v187
    %v204 = vpack.c.b16 %v190, %v189
    %v205 = vpack.c.b16 %v192, %v191
    %v206 = vpack.c.b16 %v194, %v193
    %v207 = vpack.c.b16 %v196, %v195
    %v208 = vpack.c.b16 %v198, %v197
    %v209 = vpack.c.b16 %v200, %v199
    %v210 = vpack.c.b16 %v202, %v201
    %219 = vmatprep.subr.bf16.mxu0 0
    %220 = vmatpush1.bf16.msra.mxu0 %v203
    %221 = vmatprep.subr.bf16.mxu0 0
    %222 = vmatpush1.bf16.msra.mxu0 %v204
    %223 = vmatprep.subr.bf16.mxu0 0
    %224 = vmatpush1.bf16.msra.mxu0 %v205
    %225 = vmatprep.subr.bf16.mxu0 0
    %226 = vmatpush1.bf16.msra.mxu0 %v206
    %227 = vmatprep.subr.bf16.mxu0 0
    %228 = vmatpush1.bf16.msra.mxu0 %v207
    %229 = vmatprep.subr.bf16.mxu0 0
    %230 = vmatpush1.bf16.msra.mxu0 %v208
    %231 = vmatprep.subr.bf16.mxu0 0
    %232 = vmatpush1.bf16.msra.mxu0 %v209
    %233 = vmatprep.subr.bf16.mxu0 0
    %234 = vmatpush1.bf16.msra.mxu0 %v210
    %235 = vmatprep.subr.bf16.mxu0 0
    %236 = vmatpush1.bf16.msra.mxu0 0
    %237 = vmatprep.subr.bf16.mxu0 0
    %238 = vmatpush1.bf16.msra.mxu0 0
    %239 = vmatprep.subr.bf16.mxu0 0
    %240 = vmatpush1.bf16.msra.mxu0 0
    %241 = vmatprep.subr.bf16.mxu0 0
    %242 = vmatpush1.bf16.msra.mxu0 0
    %243 = vmatprep.subr.bf16.mxu0 0
    %244 = vmatpush1.bf16.msra.mxu0 0
    %245 = vmatprep.subr.bf16.mxu0 0
    %246 = vmatpush1.bf16.msra.mxu0 0
    %247 = vmatprep.subr.bf16.mxu0 0
    %248 = vmatpush1.bf16.msra.mxu0 0
    %249 = vmatprep.subr.bf16.mxu0 0
    %250 = vmatpush1.bf16.msra.mxu0 0
    %251 = vmatprep.mubr.bf16.mxu0 0
    %252 = vmatmul.mubr.bf16.gmra.mrb[0].mxu0 %v147
    %v253 = vpop.f32.mrb[0].mxu0
    %v254 = vadd.f32 %v169, %v253
    %v255 = vpop.f32.mrb[0].mxu0
    %v256 = vpop.f32.mrb[0].mxu0
    %v257 = vadd.f32 %v169, %v256
    %v258 = vpop.f32.mrb[0].mxu0
    %259 = vdwg.mxu0
    %v260 = vpack.c.bf16 %v257, %v254
    %261 = vmatprep.subr.bf16.mxu0 0
    %262 = vmatpush1.bf16.msra.mxu0 %v260
    %263 = vmatprep.subr.bf16.mxu0 0
    %264 = vmatpush1.bf16.msra.mxu0 0
    %265 = vmatprep.subr.bf16.mxu0 0
    %266 = vmatpush1.bf16.msra.mxu0 0
    %267 = vmatprep.subr.bf16.mxu0 0
    %268 = vmatpush1.bf16.msra.mxu0 0
    %269 = vmatprep.subr.bf16.mxu0 0
    %270 = vmatpush1.bf16.msra.mxu0 0
    %271 = vmatprep.subr.bf16.mxu0 0
    %272 = vmatpush1.bf16.msra.mxu0 0
    %273 = vmatprep.subr.bf16.mxu0 0
    %274 = vmatpush1.bf16.msra.mxu0 0
    %275 = vmatprep.subr.bf16.mxu0 0
    %276 = vmatpush1.bf16.msra.mxu0 0
    %277 = vmatprep.subr.bf16.mxu0 0
    %278 = vmatpush1.bf16.msra.mxu0 0
    %279 = vmatprep.subr.bf16.mxu0 0
    %280 = vmatpush1.bf16.msra.mxu0 0
    %281 = vmatprep.subr.bf16.mxu0 0
    %282 = vmatpush1.bf16.msra.mxu0 0
    %283 = vmatprep.subr.bf16.mxu0 0
    %284 = vmatpush1.bf16.msra.mxu0 0
    %285 = vmatprep.subr.bf16.mxu0 0
    %286 = vmatpush1.bf16.msra.mxu0 0
    %287 = vmatprep.subr.bf16.mxu0 0
    %288 = vmatpush1.bf16.msra.mxu0 0
    %289 = vmatprep.subr.bf16.mxu0 0
    %290 = vmatpush1.bf16.msra.mxu0 0
    %291 = vmatprep.subr.bf16.mxu0 0
    %292 = vmatpush1.bf16.msra.mxu0 0
    %293 = vmatprep.mubr.bf16.mxu0 0
    %294 = vmatmul.mubr.bf16.gmra.mrb[0].mxu0 %v102
    %v295 = vpop.f32.mrb[0].mxu0
    %v296 = vadd.f32 0.0, %v295
    %v297 = vpop.f32.mrb[0].mxu0
    %v298 = vpop.f32.mrb[0].mxu0
    %v299 = vadd.f32 0.0, %v298
    %v300 = vpop.f32.mrb[0].mxu0
    %301 = vdwg.mxu0
    %v302 = vld [vmem:[%s6] sm:$0xff]
    %v303 = vld [vmem:[%s6 + $0x8] sm:$0xff]
    %v304 = vld [vmem:[%s6 + $0x10] sm:$0xff]
    %v305 = vld [vmem:[%s6 + $0x18] sm:$0xff]
    %v306 = vld [vmem:[%s6 + $0x20] sm:$0xff]
    %v307 = vld [vmem:[%s6 + $0x28] sm:$0xff]
    %v308 = vld [vmem:[%s6 + $0x30] sm:$0xff]
    %v309 = vld [vmem:[%s6 + $0x38] sm:$0xff]
    %v310 = vld [vmem:[%s6 + $0x40] sm:$0xff]
    %v311 = vld [vmem:[%s6 + $0x48] sm:$0xff]
    %v312 = vld [vmem:[%s6 + $0x50] sm:$0xff]
    %v313 = vld [vmem:[%s6 + $0x58] sm:$0xff]
    %v314 = vld [vmem:[%s6 + $0x60] sm:$0xff]
    %v315 = vld [vmem:[%s6 + $0x68] sm:$0xff]
    %v316 = vld [vmem:[%s6 + $0x70] sm:$0xff]
    %v317 = vld [vmem:[%s6 + $0x78] sm:$0xff]
    %v318 = vld [vmem:[%s6 + $0x80] sm:$0xff]
    %v319 = vld [vmem:[%s6 + $0x88] sm:$0xff]
    %v320 = vld [vmem:[%s6 + $0x90] sm:$0xff]
    %v321 = vld [vmem:[%s6 + $0x98] sm:$0xff]
    %v322 = vld [vmem:[%s6 + $0xa0] sm:$0xff]
    %v323 = vld [vmem:[%s6 + $0xa8] sm:$0xff]
    %v324 = vld [vmem:[%s6 + $0xb0] sm:$0xff]
    %v325 = vld [vmem:[%s6 + $0xb8] sm:$0xff]
    %v326 = vld [vmem:[%s6 + $0xc0] sm:$0xff]
    %v327 = vld [vmem:[%s6 + $0xc8] sm:$0xff]
    %v328 = vld [vmem:[%s6 + $0xd0] sm:$0xff]
    %v329 = vld [vmem:[%s6 + $0xd8] sm:$0xff]
    %v330 = vld [vmem:[%s6 + $0xe0] sm:$0xff]
    %v331 = vld [vmem:[%s6 + $0xe8] sm:$0xff]
    %v332 = vld [vmem:[%s6 + $0xf0] sm:$0xff]
    %v333 = vld [vmem:[%s6 + $0xf8] sm:$0xff]
    %v334 = vlaneseq
    %v335 = vand.u32 %v334, 127
    %336 = vset.pattern.permute.xlu0 0
    %337 = vperm.xlu0 %336, %v302
    %v338 = vpop.permute.xlu0 %337
    %339 = vset.pattern.permute.xlu0 0
    %340 = vperm.xlu0 %339, %v303
    %v341 = vpop.permute.xlu0 %340
    %342 = vset.pattern.permute.xlu0 0
    %343 = vperm.xlu0 %342, %v304
    %v344 = vpop.permute.xlu0 %343
    %345 = vset.pattern.permute.xlu0 0
    %346 = vperm.xlu0 %345, %v305
    %v347 = vpop.permute.xlu0 %346
    %348 = vset.pattern.permute.xlu0 0
    %349 = vperm.xlu0 %348, %v306
    %v350 = vpop.permute.xlu0 %349
    %351 = vset.pattern.permute.xlu0 0
    %352 = vperm.xlu0 %351, %v307
    %v353 = vpop.permute.xlu0 %352
    %354 = vset.pattern.permute.xlu0 0
    %355 = vperm.xlu0 %354, %v308
    %v356 = vpop.permute.xlu0 %355
    %357 = vset.pattern.permute.xlu0 0
    %358 = vperm.xlu0 %357, %v309
    %v359 = vpop.permute.xlu0 %358
    %360 = vset.pattern.permute.xlu0 0
    %361 = vperm.xlu0 %360, %v310
    %v362 = vpop.permute.xlu0 %361
    %363 = vset.pattern.permute.xlu0 0
    %364 = vperm.xlu0 %363, %v311
    %v365 = vpop.permute.xlu0 %364
    %366 = vset.pattern.permute.xlu0 0
    %367 = vperm.xlu0 %366, %v312
    %v368 = vpop.permute.xlu0 %367
    %369 = vset.pattern.permute.xlu0 0
    %370 = vperm.xlu0 %369, %v313
    %v371 = vpop.permute.xlu0 %370
    %372 = vset.pattern.permute.xlu0 0
    %373 = vperm.xlu0 %372, %v314
    %v374 = vpop.permute.xlu0 %373
    %375 = vset.pattern.permute.xlu0 0
    %376 = vperm.xlu0 %375, %v315
    %v377 = vpop.permute.xlu0 %376
    %378 = vset.pattern.permute.xlu0 0
    %379 = vperm.xlu0 %378, %v316
    %v380 = vpop.permute.xlu0 %379
    %381 = vset.pattern.permute.xlu0 0
    %382 = vperm.xlu0 %381, %v317
    %v383 = vpop.permute.xlu0 %382
    %384 = vset.pattern.permute.xlu0 0
    %385 = vperm.xlu0 %384, %v318
    %v386 = vpop.permute.xlu0 %385
    %387 = vset.pattern.permute.xlu0 0
    %388 = vperm.xlu0 %387, %v319
    %v389 = vpop.permute.xlu0 %388
    %390 = vset.pattern.permute.xlu0 0
    %391 = vperm.xlu0 %390, %v320
    %v392 = vpop.permute.xlu0 %391
    %393 = vset.pattern.permute.xlu0 0
    %394 = vperm.xlu0 %393, %v321
    %v395 = vpop.permute.xlu0 %394
    %396 = vset.pattern.permute.xlu0 0
    %397 = vperm.xlu0 %396, %v322
    %v398 = vpop.permute.xlu0 %397
    %399 = vset.pattern.permute.xlu0 0
    %400 = vperm.xlu0 %399, %v323
    %v401 = vpop.permute.xlu0 %400
    %402 = vset.pattern.permute.xlu0 0
    %403 = vperm.xlu0 %402, %v324
    %v404 = vpop.permute.xlu0 %403
    %405 = vset.pattern.permute.xlu0 0
    %406 = vperm.xlu0 %405, %v325
    %v407 = vpop.permute.xlu0 %406
    %408 = vset.pattern.permute.xlu0 0
    %409 = vperm.xlu0 %408, %v326
    %v410 = vpop.permute.xlu0 %409
    %411 = vset.pattern.permute.xlu0 0
    %412 = vperm.xlu0 %411, %v327
    %v413 = vpop.permute.xlu0 %412
    %414 = vset.pattern.permute.xlu0 0
    %415 = vperm.xlu0 %414, %v328
    %v416 = vpop.permute.xlu0 %415
    %417 = vset.pattern.permute.xlu0 0
    %418 = vperm.xlu0 %417, %v329
    %v419 = vpop.permute.xlu0 %418
    %420 = vset.pattern.permute.xlu0 0
    %421 = vperm.xlu0 %420, %v330
    %v422 = vpop.permute.xlu0 %421
    %423 = vset.pattern.permute.xlu0 0
    %424 = vperm.xlu0 %423, %v331
    %v425 = vpop.permute.xlu0 %424
    %426 = vset.pattern.permute.xlu0 0
    %427 = vperm.xlu0 %426, %v332
    %v428 = vpop.permute.xlu0 %427
    %429 = vset.pattern.permute.xlu0 0
    %430 = vperm.xlu0 %429, %v333
    %v431 = vpop.permute.xlu0 %430
    %vm432 = vcmp.eq.s32.totalorder %v335, %v338
    %vm433 = vcmp.eq.s32.totalorder %v335, %v341
    %vm434 = vcmp.eq.s32.totalorder %v335, %v344
    %vm435 = vcmp.eq.s32.totalorder %v335, %v347
    %vm436 = vcmp.eq.s32.totalorder %v335, %v350
    %vm437 = vcmp.eq.s32.totalorder %v335, %v353
    %vm438 = vcmp.eq.s32.totalorder %v335, %v356
    %vm439 = vcmp.eq.s32.totalorder %v335, %v359
    %vm440 = vcmp.eq.s32.totalorder %v335, %v362
    %vm441 = vcmp.eq.s32.totalorder %v335, %v365
    %vm442 = vcmp.eq.s32.totalorder %v335, %v368
    %vm443 = vcmp.eq.s32.totalorder %v335, %v371
    %vm444 = vcmp.eq.s32.totalorder %v335, %v374
    %vm445 = vcmp.eq.s32.totalorder %v335, %v377
    %vm446 = vcmp.eq.s32.totalorder %v335, %v380
    %vm447 = vcmp.eq.s32.totalorder %v335, %v383
    %vm448 = vcmp.eq.s32.totalorder %v335, %v386
    %vm449 = vcmp.eq.s32.totalorder %v335, %v389
    %vm450 = vcmp.eq.s32.totalorder %v335, %v392
    %vm451 = vcmp.eq.s32.totalorder %v335, %v395
    %vm452 = vcmp.eq.s32.totalorder %v335, %v398
    %vm453 = vcmp.eq.s32.totalorder %v335, %v401
    %vm454 = vcmp.eq.s32.totalorder %v335, %v404
    %vm455 = vcmp.eq.s32.totalorder %v335, %v407
    %vm456 = vcmp.eq.s32.totalorder %v335, %v410
    %vm457 = vcmp.eq.s32.totalorder %v335, %v413
    %vm458 = vcmp.eq.s32.totalorder %v335, %v416
    %vm459 = vcmp.eq.s32.totalorder %v335, %v419
    %vm460 = vcmp.eq.s32.totalorder %v335, %v422
    %vm461 = vcmp.eq.s32.totalorder %v335, %v425
    %vm462 = vcmp.eq.s32.totalorder %v335, %v428
    %vm463 = vcmp.eq.s32.totalorder %v335, %v431
    %v464 = vsel %vm432, 1.0, 0.0
    %v465 = vsel %vm433, 1.0, 0.0
    %v466 = vsel %vm434, 1.0, 0.0
    %v467 = vsel %vm435, 1.0, 0.0
    %v468 = vsel %vm436, 1.0, 0.0
    %v469 = vsel %vm437, 1.0, 0.0
    %v470 = vsel %vm438, 1.0, 0.0
    %v471 = vsel %vm439, 1.0, 0.0
    %v472 = vsel %vm440, 1.0, 0.0
    %v473 = vsel %vm441, 1.0, 0.0
    %v474 = vsel %vm442, 1.0, 0.0
    %v475 = vsel %vm443, 1.0, 0.0
    %v476 = vsel %vm444, 1.0, 0.0
    %v477 = vsel %vm445, 1.0, 0.0
    %v478 = vsel %vm446, 1.0, 0.0
    %v479 = vsel %vm447, 1.0, 0.0
    %v480 = vsel %vm448, 1.0, 0.0
    %v481 = vsel %vm449, 1.0, 0.0
    %v482 = vsel %vm450, 1.0, 0.0
    %v483 = vsel %vm451, 1.0, 0.0
    %v484 = vsel %vm452, 1.0, 0.0
    %v485 = vsel %vm453, 1.0, 0.0
    %v486 = vsel %vm454, 1.0, 0.0
    %v487 = vsel %vm455, 1.0, 0.0
    %v488 = vsel %vm456, 1.0, 0.0
    %v489 = vsel %vm457, 1.0, 0.0
    %v490 = vsel %vm458, 1.0, 0.0
    %v491 = vsel %vm459, 1.0, 0.0
    %v492 = vsel %vm460, 1.0, 0.0
    %v493 = vsel %vm461, 1.0, 0.0
    %v494 = vsel %vm462, 1.0, 0.0
    %v495 = vsel %vm463, 1.0, 0.0
    %v496 = vpack.c.bf16 %v465, %v464
    %v497 = vpack.c.bf16 %v467, %v466
    %v498 = vpack.c.bf16 %v469, %v468
    %v499 = vpack.c.bf16 %v471, %v470
    %v500 = vpack.c.bf16 %v473, %v472
    %v501 = vpack.c.bf16 %v475, %v474
    %v502 = vpack.c.bf16 %v477, %v476
    %v503 = vpack.c.bf16 %v479, %v478
    %v504 = vpack.c.bf16 %v481, %v480
    %v505 = vpack.c.bf16 %v483, %v482
    %v506 = vpack.c.bf16 %v485, %v484
    %v507 = vpack.c.bf16 %v487, %v486
    %v508 = vpack.c.bf16 %v489, %v488
    %v509 = vpack.c.bf16 %v491, %v490
    %v510 = vpack.c.bf16 %v493, %v492
    %v511 = vpack.c.bf16 %v495, %v494
    %v512 = vpack.c.bf16 %v299, %v296
    %v514 = vsel %vm100, %v496, 0
    %v517 = vsel %vm100, %v497, 0
    %v520 = vsel %vm100, %v498, 0
    %v523 = vsel %vm100, %v499, 0
    %v526 = vsel %vm100, %v500, 0
    %v529 = vsel %vm100, %v501, 0
    %v532 = vsel %vm100, %v502, 0
    %v535 = vsel %vm100, %v503, 0
    %v538 = vsel %vm100, %v504, 0
    %v541 = vsel %vm100, %v505, 0
    %v544 = vsel %vm100, %v506, 0
    %v547 = vsel %vm100, %v507, 0
    %v550 = vsel %vm100, %v508, 0
    %v553 = vsel %vm100, %v509, 0
    %v556 = vsel %vm100, %v510, 0
    %v559 = vsel %vm100, %v511, 0
    %561 = vmatprep.subr.bf16.mxu0 0
    %562 = vmatpush1.bf16.msra.mxu0 %v512
    %563 = vmatprep.subr.bf16.mxu0 0
    %564 = vmatpush1.bf16.msra.mxu0 0
    %565 = vmatprep.subr.bf16.mxu0 0
    %566 = vmatpush1.bf16.msra.mxu0 0
    %567 = vmatprep.subr.bf16.mxu0 0
    %568 = vmatpush1.bf16.msra.mxu0 0
    %569 = vmatprep.subr.bf16.mxu0 0
    %570 = vmatpush1.bf16.msra.mxu0 0
    %571 = vmatprep.subr.bf16.mxu0 0
    %572 = vmatpush1.bf16.msra.mxu0 0
    %573 = vmatprep.subr.bf16.mxu0 0
    %574 = vmatpush1.bf16.msra.mxu0 0
    %575 = vmatprep.subr.bf16.mxu0 0
    %576 = vmatpush1.bf16.msra.mxu0 0
    %577 = vmatprep.subr.bf16.mxu0 0
    %578 = vmatpush1.bf16.msra.mxu0 0
    %579 = vmatprep.subr.bf16.mxu0 0
    %580 = vmatpush1.bf16.msra.mxu0 0
    %581 = vmatprep.subr.bf16.mxu0 0
    %582 = vmatpush1.bf16.msra.mxu0 0
    %583 = vmatprep.subr.bf16.mxu0 0
    %584 = vmatpush1.bf16.msra.mxu0 0
    %585 = vmatprep.subr.bf16.mxu0 0
    %586 = vmatpush1.bf16.msra.mxu0 0
    %587 = vmatprep.subr.bf16.mxu0 0
    %588 = vmatpush1.bf16.msra.mxu0 0
    %589 = vmatprep.subr.bf16.mxu0 0
    %590 = vmatpush1.bf16.msra.mxu0 0
    %591 = vmatprep.subr.bf16.mxu0 0
    %592 = vmatpush1.bf16.msra.mxu0 0
    %593 = vmatprep.mubr.bf16.mxu0 0
    %594 = vmatmul.mubr.bf16.gmra.mrb[0].mxu0 %v514
    %v595 = vpop.f32.mrb[0].mxu0
    %v596 = vadd.f32 0.0, %v595
    %v597 = vpop.f32.mrb[0].mxu0
    %v598 = vpop.f32.mrb[0].mxu0
    %v599 = vadd.f32 0.0, %v598
    %v600 = vpop.f32.mrb[0].mxu0
    %601 = vmatprep.mubr.bf16.mxu0 0
    %602 = vmatmul.mubr.bf16.gmra.mrb[0].mxu0 %v517
    %v603 = vpop.f32.mrb[0].mxu0
    %v604 = vadd.f32 0.0, %v603
    %v605 = vpop.f32.mrb[0].mxu0
    %v606 = vpop.f32.mrb[0].mxu0
    %v607 = vadd.f32 0.0, %v606
    %v608 = vpop.f32.mrb[0].mxu0
    %609 = vmatprep.mubr.bf16.mxu0 0
    %610 = vmatmul.mubr.bf16.gmra.mrb[0].mxu0 %v520
    %v611 = vpop.f32.mrb[0].mxu0
    %v612 = vadd.f32 0.0, %v611
    %v613 = vpop.f32.mrb[0].mxu0
    %v614 = vpop.f32.mrb[0].mxu0
    %v615 = vadd.f32 0.0, %v614
    %v616 = vpop.f32.mrb[0].mxu0
    %617 = vmatprep.mubr.bf16.mxu0 0
    %618 = vmatmul.mubr.bf16.gmra.mrb[0].mxu0 %v523
    %v619 = vpop.f32.mrb[0].mxu0
    %v620 = vadd.f32 0.0, %v619
    %v621 = vpop.f32.mrb[0].mxu0
    %v622 = vpop.f32.mrb[0].mxu0
    %v623 = vadd.f32 0.0, %v622
    %v624 = vpop.f32.mrb[0].mxu0
    %625 = vmatprep.mubr.bf16.mxu0 0
    %626 = vmatmul.mubr.bf16.gmra.mrb[0].mxu0 %v526
    %v627 = vpop.f32.mrb[0].mxu0
    %v628 = vadd.f32 0.0, %v627
    %v629 = vpop.f32.mrb[0].mxu0
    %v630 = vpop.f32.mrb[0].mxu0
    %v631 = vadd.f32 0.0, %v630
    %v632 = vpop.f32.mrb[0].mxu0
    %633 = vmatprep.mubr.bf16.mxu0 0
    %634 = vmatmul.mubr.bf16.gmra.mrb[0].mxu0 %v529
    %v635 = vpop.f32.mrb[0].mxu0
    %v636 = vadd.f32 0.0, %v635
    %v637 = vpop.f32.mrb[0].mxu0
    %v638 = vpop.f32.mrb[0].mxu0
    %v639 = vadd.f32 0.0, %v638
    %v640 = vpop.f32.mrb[0].mxu0
    %641 = vmatprep.mubr.bf16.mxu0 0
    %642 = vmatmul.mubr.bf16.gmra.mrb[0].mxu0 %v532
    %v643 = vpop.f32.mrb[0].mxu0
    %v644 = vadd.f32 0.0, %v643
    %v645 = vpop.f32.mrb[0].mxu0
    %v646 = vpop.f32.mrb[0].mxu0
    %v647 = vadd.f32 0.0, %v646
    %v648 = vpop.f32.mrb[0].mxu0
    %649 = vmatprep.mubr.bf16.mxu0 0
    %650 = vmatmul.mubr.bf16.gmra.mrb[0].mxu0 %v535
    %v651 = vpop.f32.mrb[0].mxu0
    %v652 = vadd.f32 0.0, %v651
    %v653 = vpop.f32.mrb[0].mxu0
    %v654 = vpop.f32.mrb[0].mxu0
    %v655 = vadd.f32 0.0, %v654
    %v656 = vpop.f32.mrb[0].mxu0
    %657 = vmatprep.mubr.bf16.mxu0 0
    %658 = vmatmul.mubr.bf16.gmra.mrb[0].mxu0 %v538
    %v659 = vpop.f32.mrb[0].mxu0
    %v660 = vadd.f32 0.0, %v659
    %v661 = vpop.f32.mrb[0].mxu0
    %v662 = vpop.f32.mrb[0].mxu0
    %v663 = vadd.f32 0.0, %v662
    %v664 = vpop.f32.mrb[0].mxu0
    %665 = vmatprep.mubr.bf16.mxu0 0
    %666 = vmatmul.mubr.bf16.gmra.mrb[0].mxu0 %v541
    %v667 = vpop.f32.mrb[0].mxu0
    %v668 = vadd.f32 0.0, %v667
    %v669 = vpop.f32.mrb[0].mxu0
    %v670 = vpop.f32.mrb[0].mxu0
    %v671 = vadd.f32 0.0, %v670
    %v672 = vpop.f32.mrb[0].mxu0
    %673 = vmatprep.mubr.bf16.mxu0 0
    %674 = vmatmul.mubr.bf16.gmra.mrb[0].mxu0 %v544
    %v675 = vpop.f32.mrb[0].mxu0
    %v676 = vadd.f32 0.0, %v675
    %v677 = vpop.f32.mrb[0].mxu0
    %v678 = vpop.f32.mrb[0].mxu0
    %v679 = vadd.f32 0.0, %v678
    %v680 = vpop.f32.mrb[0].mxu0
    %681 = vmatprep.mubr.bf16.mxu0 0
    %682 = vmatmul.mubr.bf16.gmra.mrb[0].mxu0 %v547
    %v683 = vpop.f32.mrb[0].mxu0
    %v684 = vadd.f32 0.0, %v683
    %v685 = vpop.f32.mrb[0].mxu0
    %v686 = vpop.f32.mrb[0].mxu0
    %v687 = vadd.f32 0.0, %v686
    %v688 = vpop.f32.mrb[0].mxu0
    %689 = vmatprep.mubr.bf16.mxu0 0
    %690 = vmatmul.mubr.bf16.gmra.mrb[0].mxu0 %v550
    %v691 = vpop.f32.mrb[0].mxu0
    %v692 = vadd.f32 0.0, %v691
    %v693 = vpop.f32.mrb[0].mxu0
    %v694 = vpop.f32.mrb[0].mxu0
    %v695 = vadd.f32 0.0, %v694
    %v696 = vpop.f32.mrb[0].mxu0
    %697 = vmatprep.mubr.bf16.mxu0 0
    %698 = vmatmul.mubr.bf16.gmra.mrb[0].mxu0 %v553
    %v699 = vpop.f32.mrb[0].mxu0
    %v700 = vadd.f32 0.0, %v699
    %v701 = vpop.f32.mrb[0].mxu0
    %v702 = vpop.f32.mrb[0].mxu0
    %v703 = vadd.f32 0.0, %v702
    %v704 = vpop.f32.mrb[0].mxu0
    %705 = vmatprep.mubr.bf16.mxu0 0
    %706 = vmatmul.mubr.bf16.gmra.mrb[0].mxu0 %v556
    %v707 = vpop.f32.mrb[0].mxu0
    %v708 = vadd.f32 0.0, %v707
    %v709 = vpop.f32.mrb[0].mxu0
    %v710 = vpop.f32.mrb[0].mxu0
    %v711 = vadd.f32 0.0, %v710
    %v712 = vpop.f32.mrb[0].mxu0
    %713 = vmatprep.mubr.bf16.mxu0 0
    %714 = vmatmul.mubr.bf16.gmra.mrb[0].mxu0 %v559
    %v715 = vpop.f32.mrb[0].mxu0
    %v716 = vadd.f32 0.0, %v715
    %v717 = vpop.f32.mrb[0].mxu0
    %v718 = vpop.f32.mrb[0].mxu0
    %v719 = vadd.f32 0.0, %v718
    %v720 = vpop.f32.mrb[0].mxu0
    %721 = vdwg.mxu0
    %v722 = vmul.f32 %v596, %v660
    %v723 = vmul.f32 %v599, %v663
    %v724 = vmul.f32 %v604, %v668
    %v725 = vmul.f32 %v607, %v671
    %v726 = vmul.f32 %v612, %v676
    %v727 = vmul.f32 %v615, %v679
    %v728 = vmul.f32 %v620, %v684
    %v729 = vmul.f32 %v623, %v687
    %v730 = vmul.f32 %v628, %v692
    %v731 = vmul.f32 %v631, %v695
    %v732 = vmul.f32 %v636, %v700
    %v733 = vmul.f32 %v639, %v703
    %v734 = vmul.f32 %v644, %v708
    %v735 = vmul.f32 %v647, %v711
    %v736 = vmul.f32 %v652, %v716
    %v737 = vmul.f32 %v655, %v719
    %738 = vmatprep.subr.mxu0 0.0
    %739 = vmatpush1.msra.mxu0 1.0
    %740 = vmatprep.subr.mxu0 0.0
    %741 = vmatpush1.msra.mxu0 1.0
    %742 = vmatprep.subr.mxu0 0.0
    %743 = vmatpush1.msra.mxu0 1.0
    %744 = vmatprep.subr.mxu0 0.0
    %745 = vmatpush1.msra.mxu0 1.0
    %746 = vmatprep.subr.mxu0 0.0
    %747 = vmatpush1.msra.mxu0 1.0
    %748 = vmatprep.subr.mxu0 0.0
    %749 = vmatpush1.msra.mxu0 1.0
    %750 = vmatprep.subr.mxu0 0.0
    %751 = vmatpush1.msra.mxu0 1.0
    %752 = vmatprep.subr.mxu0 0.0
    %753 = vmatpush1.msra.mxu0 1.0
    %754 = vmatprep.subr.mxu0 0.0
    %755 = vmatpush1.msra.mxu0 1.0
    %756 = vmatprep.subr.mxu0 0.0
    %757 = vmatpush1.msra.mxu0 1.0
    %758 = vmatprep.subr.mxu0 0.0
    %759 = vmatpush1.msra.mxu0 1.0
    %760 = vmatprep.subr.mxu0 0.0
    %761 = vmatpush1.msra.mxu0 1.0
    %762 = vmatprep.subr.mxu0 0.0
    %763 = vmatpush1.msra.mxu0 1.0
    %764 = vmatprep.subr.mxu0 0.0
    %765 = vmatpush1.msra.mxu0 1.0
    %766 = vmatprep.subr.mxu0 0.0
    %767 = vmatpush1.msra.mxu0 1.0
    %768 = vmatprep.subr.mxu0 0.0
    %769 = vmatpush1.msra.mxu0 1.0
    %770 = vmatprep.subr.mxu0 0.0
    %771 = vmatpush1.msra.mxu0 0.0
    %772 = vmatprep.subr.mxu0 0.0
    %773 = vmatpush1.msra.mxu0 0.0
    %774 = vmatprep.subr.mxu0 0.0
    %775 = vmatpush1.msra.mxu0 0.0
    %776 = vmatprep.subr.mxu0 0.0
    %777 = vmatpush1.msra.mxu0 0.0
    %778 = vmatprep.subr.mxu0 0.0
    %779 = vmatpush1.msra.mxu0 0.0
    %780 = vmatprep.subr.mxu0 0.0
    %781 = vmatpush1.msra.mxu0 0.0
    %782 = vmatprep.subr.mxu0 0.0
    %783 = vmatpush1.msra.mxu0 0.0
    %784 = vmatprep.subr.mxu0 0.0
    %785 = vmatpush1.msra.mxu0 0.0
    %786 = vmatprep.subr.mxu0 0.0
    %787 = vmatpush1.msra.mxu0 0.0
    %788 = vmatprep.subr.mxu0 0.0
    %789 = vmatpush1.msra.mxu0 0.0
    %790 = vmatprep.subr.mxu0 0.0
    %791 = vmatpush1.msra.mxu0 0.0
    %792 = vmatprep.subr.mxu0 0.0
    %793 = vmatpush1.msra.mxu0 0.0
    %794 = vmatprep.subr.mxu0 0.0
    %795 = vmatpush1.msra.mxu0 0.0
    %796 = vmatprep.subr.mxu0 0.0
    %797 = vmatpush1.msra.mxu0 0.0
    %798 = vmatprep.subr.mxu0 0.0
    %799 = vmatpush1.msra.mxu0 0.0
    %800 = vmatprep.subr.mxu0 0.0
    %801 = vmatpush1.msra.mxu0 0.0
    %802 = vmatprep.mubr.f32.mxu0 0.0
    %803 = vmatmul.mubr.f32.gmra.mrb[0].mxu0 %v722
    %v804 = vpop.f32.mrb[0].mxu0
    %v805 = vadd.f32 0.0, %v804
    %v806 = vpop.f32.mrb[0].mxu0
    %807 = vmatprep.mubr.f32.mxu0 0.0
    %808 = vmatmul.mubr.f32.gmra.mrb[0].mxu0 %v723
    %v809 = vpop.f32.mrb[0].mxu0
    %v810 = vadd.f32 0.0, %v809
    %v811 = vpop.f32.mrb[0].mxu0
    %812 = vmatprep.mubr.f32.mxu0 0.0
    %813 = vmatmul.mubr.f32.gmra.mrb[0].mxu0 %v724
    %v814 = vpop.f32.mrb[0].mxu0
    %v815 = vadd.f32 0.0, %v814
    %v816 = vpop.f32.mrb[0].mxu0
    %817 = vmatprep.mubr.f32.mxu0 0.0
    %818 = vmatmul.mubr.f32.gmra.mrb[0].mxu0 %v725
    %v819 = vpop.f32.mrb[0].mxu0
    %v820 = vadd.f32 0.0, %v819
    %v821 = vpop.f32.mrb[0].mxu0
    %822 = vmatprep.mubr.f32.mxu0 0.0
    %823 = vmatmul.mubr.f32.gmra.mrb[0].mxu0 %v726
    %v824 = vpop.f32.mrb[0].mxu0
    %v825 = vadd.f32 0.0, %v824
    %v826 = vpop.f32.mrb[0].mxu0
    %827 = vmatprep.mubr.f32.mxu0 0.0
    %828 = vmatmul.mubr.f32.gmra.mrb[0].mxu0 %v727
    %v829 = vpop.f32.mrb[0].mxu0
    %v830 = vadd.f32 0.0, %v829
    %v831 = vpop.f32.mrb[0].mxu0
    %832 = vmatprep.mubr.f32.mxu0 0.0
    %833 = vmatmul.mubr.f32.gmra.mrb[0].mxu0 %v728
    %v834 = vpop.f32.mrb[0].mxu0
    %v835 = vadd.f32 0.0, %v834
    %v836 = vpop.f32.mrb[0].mxu0
    %837 = vmatprep.mubr.f32.mxu0 0.0
    %838 = vmatmul.mubr.f32.gmra.mrb[0].mxu0 %v729
    %v839 = vpop.f32.mrb[0].mxu0
    %v840 = vadd.f32 0.0, %v839
    %v841 = vpop.f32.mrb[0].mxu0
    %842 = vmatprep.mubr.f32.mxu0 0.0
    %843 = vmatmul.mubr.f32.gmra.mrb[0].mxu0 %v730
    %v844 = vpop.f32.mrb[0].mxu0
    %v845 = vadd.f32 0.0, %v844
    %v846 = vpop.f32.mrb[0].mxu0
    %847 = vmatprep.mubr.f32.mxu0 0.0
    %848 = vmatmul.mubr.f32.gmra.mrb[0].mxu0 %v731
    %v849 = vpop.f32.mrb[0].mxu0
    %v850 = vadd.f32 0.0, %v849
    %v851 = vpop.f32.mrb[0].mxu0
    %852 = vmatprep.mubr.f32.mxu0 0.0
    %853 = vmatmul.mubr.f32.gmra.mrb[0].mxu0 %v732
    %v854 = vpop.f32.mrb[0].mxu0
    %v855 = vadd.f32 0.0, %v854
    %v856 = vpop.f32.mrb[0].mxu0
    %857 = vmatprep.mubr.f32.mxu0 0.0
    %858 = vmatmul.mubr.f32.gmra.mrb[0].mxu0 %v733
    %v859 = vpop.f32.mrb[0].mxu0
    %v860 = vadd.f32 0.0, %v859
    %v861 = vpop.f32.mrb[0].mxu0
    %862 = vmatprep.mubr.f32.mxu0 0.0
    %863 = vmatmul.mubr.f32.gmra.mrb[0].mxu0 %v734
    %v864 = vpop.f32.mrb[0].mxu0
    %v865 = vadd.f32 0.0, %v864
    %v866 = vpop.f32.mrb[0].mxu0
    %867 = vmatprep.mubr.f32.mxu0 0.0
    %868 = vmatmul.mubr.f32.gmra.mrb[0].mxu0 %v735
    %v869 = vpop.f32.mrb[0].mxu0
    %v870 = vadd.f32 0.0, %v869
    %v871 = vpop.f32.mrb[0].mxu0
    %872 = vmatprep.mubr.f32.mxu0 0.0
    %873 = vmatmul.mubr.f32.gmra.mrb[0].mxu0 %v736
    %v874 = vpop.f32.mrb[0].mxu0
    %v875 = vadd.f32 0.0, %v874
    %v876 = vpop.f32.mrb[0].mxu0
    %877 = vmatprep.mubr.f32.mxu0 0.0
    %878 = vmatmul.mubr.f32.gmra.mrb[0].mxu0 %v737
    %v879 = vpop.f32.mrb[0].mxu0
    %v880 = vadd.f32 0.0, %v879
    %v881 = vpop.f32.mrb[0].mxu0
    %882 = vdwg.mxu0
    %883 = vst [vmem:[#allocation2] sm:$0xff] %v805
    %884 = vst [vmem:[#allocation2 + $0x8] sm:$0xff] %v810
    %885 = vst [vmem:[#allocation2 + $0x10] sm:$0xff] %v815
    %886 = vst [vmem:[#allocation2 + $0x18] sm:$0xff] %v820
    %887 = vst [vmem:[#allocation2 + $0x20] sm:$0xff] %v825
    %888 = vst [vmem:[#allocation2 + $0x28] sm:$0xff] %v830
    %889 = vst [vmem:[#allocation2 + $0x30] sm:$0xff] %v835
    %890 = vst [vmem:[#allocation2 + $0x38] sm:$0xff] %v840
    %891 = vst [vmem:[#allocation2 + $0x40] sm:$0xff] %v845
    %892 = vst [vmem:[#allocation2 + $0x48] sm:$0xff] %v850
    %893 = vst [vmem:[#allocation2 + $0x50] sm:$0xff] %v855
    %894 = vst [vmem:[#allocation2 + $0x58] sm:$0xff] %v860
    %895 = vst [vmem:[#allocation2 + $0x60] sm:$0xff] %v865
    %896 = vst [vmem:[#allocation2 + $0x68] sm:$0xff] %v870
    %897 = vst [vmem:[#allocation2 + $0x70] sm:$0xff] %v875
    %898 = vst [vmem:[#allocation2 + $0x78] sm:$0xff] %v880
    // Predicated region
    $region30: #{tpu_custom_call.1} parent=1 // pred_check
      _
    $region31: #{tpu_custom_call.1} parent=1 // pred_check_branch
      %900 = sbr.rel (0) target = $region33
    $region32: #{tpu_custom_call.1} parent=1 // pred_region
      %s902 = ssub.s32 2048, 2048
      %903 = vsyncadd [#allocation3], %s902
      %s904 = sshll.u32 [#allocation2], 4
      %s905 = int_to_ptr.vmem [resolvable:$true] %s904
      %910 = dma.vmem_to_hbm [thread:$0]  %s905, 2048, %s7, [#allocation3], 128, 128, 8
    $region33: #{tpu_custom_call.1} parent=1 // pred_fallthru
      _
    // Predicated region
    $region34: #{tpu_custom_call.1} parent=1 // pred_check
      _
    $region35: #{tpu_custom_call.1} parent=1 // pred_check_branch
      %912 = sbr.rel (0) target = $region37
    $region36: #{tpu_custom_call.1} parent=1 // pred_region
      %913 = dma.done [#allocation3], 2048
    $region37: #{tpu_custom_call.1} parent=1 // pred_fallthru
      _
    %914 = vsyncpa [#allocation3], 1

</llo_original>
